<compile_context>
chip_gen: v5e
topology: v5e:2x2
jax: 0.10.0
libtpu: 0.0.40
codegen_flags: <defaults>
</compile_context>

<pallas_src>
import functools
import math

import jax
import jax.numpy as jnp
from jax.experimental import pallas as pl
from jax.experimental.pallas import tpu as pltpu


def _cdiv(a, b):
    return (a + b - 1) // b


def _round_up(a, b):
    return _cdiv(a, b) * b


def _gelu_f32(h, approximate):
    # GELU in f32 (v5e EUP/VPU have no bf16). Default: exact erf = torch.nn.GELU().
    if approximate:
        return jax.nn.gelu(h, approximate=True)          # tanh -> EUP slot
    return 0.5 * h * (1.0 + jax.lax.erf(h * (1.0 / math.sqrt(2.0))))


def _ffn_kernel_fused(x_ref, w1_ref, b1_ref, w2_ref, b2_ref, o_ref, *,
                      approximate_gelu):
    # Single-K path: whole d_ff resident.  No accumulator round-trip.
    # x_ref : (tm, d_model)   w1_ref : (d_model, d_ff)   b1_ref : (1, d_ff)
    # w2_ref: (d_ff, d_model) b2_ref : (1, d_model)      o_ref  : (tm, d_model)
    x = x_ref[...].astype(w1_ref.dtype)
    h = jnp.dot(x, w1_ref[...], preferred_element_type=jnp.float32)
    h = h + b1_ref[...].astype(jnp.float32)
    h = _gelu_f32(h, approximate_gelu)
    # dropout: identity in eval mode
    # TODO(synk): training-mode dropout (stochastic mask via pltpu.prng_*) not implemented.
    h = h.astype(w2_ref.dtype)
    y = jnp.dot(h, w2_ref[...], preferred_element_type=jnp.float32)
    o_ref[...] = (y + b2_ref[...].astype(jnp.float32)).astype(o_ref.dtype)


def _ffn_kernel_ktiled(x_ref, w1_ref, b1_ref, w2_ref, b2_ref, o_ref, acc_ref, *,
                       approximate_gelu):
    # K-tiled path over d_ff chunks.
    # x_ref : (tm, d_model)     w1_ref : (d_model, tf)   b1_ref : (1, tf)
    # w2_ref: (tf, d_model)     b2_ref : (1, d_model)
    # o_ref : (tm, d_model)     acc_ref: (tm, d_model) f32 scratch (persists over k)
    k = pl.program_id(1)

    @pl.when(k == 0)
    def _init():
        acc_ref[...] = jnp.zeros_like(acc_ref)

    x = x_ref[...].astype(w1_ref.dtype)
    h = jnp.dot(x, w1_ref[...], preferred_element_type=jnp.float32)
    h = h + b1_ref[...].astype(jnp.float32)
    h = _gelu_f32(h, approximate_gelu)
    # dropout: identity in eval mode
    h = h.astype(w2_ref.dtype)
    acc_ref[...] += jnp.dot(h, w2_ref[...], preferred_element_type=jnp.float32)

    @pl.when(k == pl.num_programs(1) - 1)
    def _finalize():
        o_ref[...] = (acc_ref[...] + b2_ref[...].astype(jnp.float32)).astype(o_ref.dtype)


def _pick_row_tile(M, d_model, x_itemsize, tm):
    """Row tile: multiple of 8, VMEM-clamped, <= padded M, keep >=2 tiles when possible."""
    # keep one (tm, d_model) activation tile around <= ~2 MiB
    max_rows = max(8, ((2 * 1024 * 1024) // max(1, d_model * x_itemsize)) // 8 * 8)
    tm = min(tm, max_rows)
    tm = max(8, min(tm, _round_up(M, 8)))
    tm = (tm // 8) * 8
    if M > 8 and _cdiv(M, tm) < 2:
        tm = max(8, _round_up(_cdiv(M, 2), 8))
    return tm


def _pick_ff_tile(d_ff, d_model, w_itemsize, tf):
    """d_ff chunk: multiple of 128 dividing d_ff, or full d_ff.

    tf=None -> auto: use full d_ff when the two double-buffered weight chunks fit
    a ~24 MiB budget, otherwise the largest fitting divisor."""
    if tf is not None:
        tf = min(tf, d_ff)
        if tf == d_ff:
            return d_ff
        if d_ff % tf == 0 and tf % 128 == 0:
            return tf
        cap = (tf // 128) * 128
    else:
        budget = 24 * 1024 * 1024
        cap = budget // max(1, 4 * d_model * w_itemsize)   # 2 chunks x double-buffer
        if cap >= d_ff:
            return d_ff
        cap = (cap // 128) * 128
    c = cap
    while c >= 128:
        if d_ff % c == 0:
            return c
        c -= 128
    return d_ff  # no usable divisor: fall back to no K-tiling


@functools.partial(jax.jit, static_argnames=("tm", "tf", "approximate_gelu"))
def positionwise_ffn(x, w1, b1, w2, b2, *, tm=256, tf=None, approximate_gelu=False):
    """x: (..., d_model) -> (..., d_model).  w1:(d_model,d_ff), w2:(d_ff,d_model)."""
    d_model = x.shape[-1]
    d_ff = w1.shape[1]
    lead_shape = x.shape[:-1]
    M = int(math.prod(lead_shape)) if lead_shape else 1
    x_flat = x.reshape(M, d_model)

    x_itemsize = jnp.dtype(x.dtype).itemsize
    w_itemsize = jnp.dtype(w1.dtype).itemsize

    tm_eff = _pick_row_tile(M, d_model, x_itemsize, tm)
    tf_eff = _pick_ff_tile(d_ff, d_model, w_itemsize, tf)

    M_pad = _round_up(M, tm_eff)
    if M_pad != M:
        x_flat = jnp.pad(x_flat, ((0, M_pad - M), (0, 0)))

    row_tiles = M_pad // tm_eff
    ff_chunks = d_ff // tf_eff

    b1_2d = b1.reshape(1, d_ff)
    b2_2d = b2.reshape(1, d_model)

    def nbytes(shape, dtype):
        return int(math.prod(shape)) * jnp.dtype(dtype).itemsize

    # VMEM budget: double-buffered inputs/output + f32 accumulator + h intermediate.
    vmem_bytes = (
        2 * nbytes((tm_eff, d_model), x.dtype)        # x tile
        + 2 * nbytes((d_model, tf_eff), w1.dtype)     # W1 chunk
        + 2 * nbytes((1, tf_eff), b1.dtype)           # b1 chunk
        + 2 * nbytes((tf_eff, d_model), w2.dtype)     # W2 chunk
        + 2 * nbytes((1, d_model), b2.dtype)          # b2
        + 2 * nbytes((tm_eff, d_model), x.dtype)      # out tile
        + nbytes((tm_eff, d_model), jnp.float32)      # accumulator scratch (k-tiled)
        + nbytes((tm_eff, tf_eff), jnp.float32)       # h intermediate headroom
    )
    # Leave headroom, stay under v7x's 64 MiB physical VMEM.
    vmem_limit = min(48 * 1024 * 1024, max(16 * 1024 * 1024, int(vmem_bytes * 1.5)))

    cost = pl.CostEstimate(
        flops=2 * 2 * M_pad * d_model * d_ff,
        transcendentals=M_pad * d_ff,
        bytes_accessed=(2 * nbytes((M_pad, d_model), x.dtype)
                        + nbytes((d_model, d_ff), w1.dtype)
                        + nbytes((d_ff, d_model), w2.dtype)
                        + nbytes((d_ff,), b1.dtype)
                        + nbytes((d_model,), b2.dtype)),
    )

    if ff_chunks == 1:
        # Fused single-K kernel: weights resident, no accumulator round-trip.
        kernel = functools.partial(_ffn_kernel_fused, approximate_gelu=approximate_gelu)
        grid_spec = pltpu.PrefetchScalarGridSpec(
            num_scalar_prefetch=0,
            grid=(row_tiles,),
            in_specs=[
                pl.BlockSpec((tm_eff, d_model), lambda i: (i, 0)),   # x rows
                pl.BlockSpec((d_model, d_ff), lambda i: (0, 0)),     # W1 (resident)
                pl.BlockSpec((1, d_ff), lambda i: (0, 0)),           # b1
                pl.BlockSpec((d_ff, d_model), lambda i: (0, 0)),     # W2 (resident)
                pl.BlockSpec((1, d_model), lambda i: (0, 0)),        # b2
            ],
            out_specs=pl.BlockSpec((tm_eff, d_model), lambda i: (i, 0)),
            scratch_shapes=[],
        )
        dim_sem = ("parallel",)
    else:
        # K-tiled accumulation kernel: reduction axis (d_ff chunks) innermost.
        kernel = functools.partial(_ffn_kernel_ktiled, approximate_gelu=approximate_gelu)
        grid_spec = pltpu.PrefetchScalarGridSpec(
            num_scalar_prefetch=0,
            grid=(row_tiles, ff_chunks),
            in_specs=[
                pl.BlockSpec((tm_eff, d_model), lambda i, k: (i, 0)),   # x rows (resident over k)
                pl.BlockSpec((d_model, tf_eff), lambda i, k: (0, k)),   # W1 column chunk
                pl.BlockSpec((1, tf_eff), lambda i, k: (0, k)),         # b1 chunk
                pl.BlockSpec((tf_eff, d_model), lambda i, k: (k, 0)),   # W2 row chunk
                pl.BlockSpec((1, d_model), lambda i, k: (0, 0)),        # b2
            ],
            out_specs=pl.BlockSpec((tm_eff, d_model), lambda i, k: (i, 0)),
            scratch_shapes=[pltpu.VMEM((tm_eff, d_model), jnp.float32)],
        )
        dim_sem = ("parallel", "arbitrary")

    out_flat = pl.pallas_call(
        kernel,
        out_shape=jax.ShapeDtypeStruct((M_pad, d_model), x.dtype),
        grid_spec=grid_spec,
        compiler_params=pltpu.CompilerParams(
            dimension_semantics=dim_sem,
            vmem_limit_bytes=vmem_limit,
        ),
        cost_estimate=cost,
    )(x_flat, w1, b1_2d, w2, b2_2d)

    if M_pad != M:
        out_flat = out_flat[:M]
    return out_flat.reshape(*lead_shape, d_model)


def init_params(key, d_model, d_ff, dtype=jnp.float32):
    """Deterministic init mimicking nn.Linear defaults (uniform +-1/sqrt(fan_in))."""
    k1, k2, k3, k4 = jax.random.split(key, 4)
    lim1 = 1.0 / math.sqrt(d_model)
    lim2 = 1.0 / math.sqrt(d_ff)
    # stored transposed relative to torch: (in, out)
    w1 = jax.random.uniform(k1, (d_model, d_ff), dtype, -lim1, lim1)
    b1 = jax.random.uniform(k2, (d_ff,), dtype, -lim1, lim1)
    w2 = jax.random.uniform(k3, (d_ff, d_model), dtype, -lim2, lim2)
    b2 = jax.random.uniform(k4, (d_model,), dtype, -lim2, lim2)
    return w1, b1, w2, b2


def _reference(x, w1, b1, w2, b2):
    h = x @ w1 + b1
    h = 0.5 * h * (1.0 + jax.lax.erf(h / math.sqrt(2.0)))
    return h @ w2 + b2


if __name__ == "__main__":
    # small shapes consistent with the module's forward: (batch, seq, d_model)
    batch, seq, d_model, d_ff = 2, 8, 128, 512
    key = jax.random.PRNGKey(0)
    kx, kp, kx2 = jax.random.split(key, 3)
    x = jax.random.normal(kx, (batch, seq, d_model), jnp.float32)
    w1, b1, w2, b2 = init_params(kp, d_model, d_ff)

    # Auto tile selection: weights fit the VMEM budget -> fused single-K kernel.
    out = jax.block_until_ready(positionwise_ffn(x, w1, b1, w2, b2))
    ref = _reference(x, w1, b1, w2, b2)
    assert out.shape == (batch, seq, d_model)
    assert jnp.allclose(out, ref, atol=1e-4, rtol=1e-4), "mismatch vs reference (fused path)"

    # Explicit tf=256 forces the K-tiled accumulation path (2 d_ff chunks);
    # ragged row count (M=13) also exercises the pad-to-tile / clip path.
    x2 = jax.random.normal(kx2, (13, d_model), jnp.float32)
    out2 = jax.block_until_ready(positionwise_ffn(x2, w1, b1, w2, b2, tf=256))
    ref2 = _reference(x2, w1, b1, w2, b2)
    assert out2.shape == (13, d_model)
    assert jnp.allclose(out2, ref2, atol=1e-4, rtol=1e-4), "mismatch vs reference (K-tiled path)"

    print("KERNEL_OK")
</pallas_src>

<mosaic_0001>
module attributes {stable_mosaic.version = 11 : i64} {
  func.func @_ffn_kernel_fused(%arg0: i32, %arg1: memref<8x128xf32, #tpu.memory_space<vmem>>, %arg2: memref<128x512xf32, #tpu.memory_space<vmem>>, %arg3: memref<1x512xf32, #tpu.memory_space<vmem>>, %arg4: memref<512x128xf32, #tpu.memory_space<vmem>>, %arg5: memref<1x128xf32, #tpu.memory_space<vmem>>, %arg6: memref<8x128xf32, #tpu.memory_space<vmem>>) attributes {dimension_semantics = [#tpu.dimension_semantics<parallel>], iteration_bounds = array<i64: 2>, scalar_prefetch = 0 : i64, scratch_operands = 0 : i64, tpu.core_type = #tpu.core_type<tc>, window_params = [{transform_indices = @transform_0, window_bounds = array<i64: 8, 128>}, {pipeline_mode = #tpu.pipeline_mode<synchronous>, transform_indices = @transform_1, window_bounds = array<i64: 128, 512>}, {pipeline_mode = #tpu.pipeline_mode<synchronous>, transform_indices = @transform_2, window_bounds = array<i64: 1, 512>}, {pipeline_mode = #tpu.pipeline_mode<synchronous>, transform_indices = @transform_3, window_bounds = array<i64: 512, 128>}, {pipeline_mode = #tpu.pipeline_mode<synchronous>, transform_indices = @transform_4, window_bounds = array<i64: 1, 128>}, {transform_indices = @transform_5, window_bounds = array<i64: 8, 128>}]} {
    %c0 = arith.constant 0 : index
    %c0_0 = arith.constant 0 : index
    %0 = vector.load %arg1[%c0, %c0_0] : memref<8x128xf32, #tpu.memory_space<vmem>>, vector<8x128xf32>
    %c0_1 = arith.constant 0 : index
    %c0_2 = arith.constant 0 : index
    %1 = vector.load %arg2[%c0_1, %c0_2] : memref<128x512xf32, #tpu.memory_space<vmem>>, vector<128x512xf32>
    %cst = arith.constant dense<0.000000e+00> : vector<8x512xf32>
    %2 = tpu.matmul %0, %1, %cst {dimension_numbers = #tpu.dot_dimension_numbers<[1], [0], [0], [1], [0, 0, 1, 1], [], []>} : vector<8x128xf32>, vector<128x512xf32>, vector<8x512xf32> -> vector<8x512xf32>
    %c0_3 = arith.constant 0 : index
    %c0_4 = arith.constant 0 : index
    %3 = vector.load %arg3[%c0_3, %c0_4] : memref<1x512xf32, #tpu.memory_space<vmem>>, vector<1x512xf32>
    %4 = vector.broadcast %3 : vector<1x512xf32> to vector<8x512xf32>
    %5 = arith.addf %2, %4 : vector<8x512xf32>
    %cst_5 = arith.constant 5.000000e-01 : f32
    %6 = vector.broadcast %cst_5 : f32 to vector<8x512xf32>
    %7 = arith.mulf %6, %5 : vector<8x512xf32>
    %cst_6 = arith.constant 0.707106769 : f32
    %8 = vector.broadcast %cst_6 : f32 to vector<8x512xf32>
    %9 = arith.mulf %5, %8 : vector<8x512xf32>
    %10 = math.erf %9 : vector<8x512xf32>
    %cst_7 = arith.constant 1.000000e+00 : f32
    %11 = vector.broadcast %cst_7 : f32 to vector<8x512xf32>
    %12 = arith.addf %11, %10 : vector<8x512xf32>
    %13 = arith.mulf %7, %12 : vector<8x512xf32>
    %c0_8 = arith.constant 0 : index
    %c0_9 = arith.constant 0 : index
    %14 = vector.load %arg4[%c0_8, %c0_9] : memref<512x128xf32, #tpu.memory_space<vmem>>, vector<512x128xf32>
    %cst_10 = arith.constant dense<0.000000e+00> : vector<8x128xf32>
    %15 = tpu.matmul %13, %14, %cst_10 {dimension_numbers = #tpu.dot_dimension_numbers<[1], [0], [0], [1], [0, 0, 1, 1], [], []>} : vector<8x512xf32>, vector<512x128xf32>, vector<8x128xf32> -> vector<8x128xf32>
    %c0_11 = arith.constant 0 : index
    %c0_12 = arith.constant 0 : index
    %16 = vector.load %arg5[%c0_11, %c0_12] : memref<1x128xf32, #tpu.memory_space<vmem>>, vector<1x128xf32>
    %17 = vector.broadcast %16 : vector<1x128xf32> to vector<8x128xf32>
    %18 = arith.addf %15, %17 : vector<8x128xf32>
    %c0_13 = arith.constant 0 : index
    %c0_14 = arith.constant 0 : index
    %19 = vector.load %arg6[%c0_13, %c0_14] : memref<8x128xf32, #tpu.memory_space<vmem>>, vector<8x128xf32>
    tpu.vector_store %arg6[%c0_13, %c0_14], %18 {strides = array<i32>} : memref<8x128xf32, #tpu.memory_space<vmem>>, vector<8x128xf32>,
    return
  }
  func.func @transform_0(%arg0: i32) -> (i32, i32) {
    %c0_i32 = arith.constant 0 : i32
    %c0_i32_0 = arith.constant 0 : i32
    return %arg0, %c0_i32 : i32, i32
  }
  func.func @transform_1(%arg0: i32) -> (i32, i32) {
    %c0_i32 = arith.constant 0 : i32
    %c0_i32_0 = arith.constant 0 : i32
    %c0_i32_1 = arith.constant 0 : i32
    return %c0_i32, %c0_i32_0 : i32, i32
  }
  func.func @transform_2(%arg0: i32) -> (i32, i32) {
    %c0_i32 = arith.constant 0 : i32
    %c0_i32_0 = arith.constant 0 : i32
    %c0_i32_1 = arith.constant 0 : i32
    return %c0_i32, %c0_i32_0 : i32, i32
  }
  func.func @transform_3(%arg0: i32) -> (i32, i32) {
    %c0_i32 = arith.constant 0 : i32
    %c0_i32_0 = arith.constant 0 : i32
    %c0_i32_1 = arith.constant 0 : i32
    return %c0_i32, %c0_i32_0 : i32, i32
  }
  func.func @transform_4(%arg0: i32) -> (i32, i32) {
    %c0_i32 = arith.constant 0 : i32
    %c0_i32_0 = arith.constant 0 : i32
    %c0_i32_1 = arith.constant 0 : i32
    return %c0_i32, %c0_i32_0 : i32, i32
  }
  func.func @transform_5(%arg0: i32) -> (i32, i32) {
    %c0_i32 = arith.constant 0 : i32
    %c0_i32_0 = arith.constant 0 : i32
    return %arg0, %c0_i32 : i32, i32
  }
}

</mosaic_0001>

<llo_original>
// kernel: positionwise_ffn.1
$region0: #{positionwise_ffn.1}
  #allocation0 [shape = 'u32[]', space=smem, size = 0x4, offset = 0x4, fixed_abs, tag = 'smem constant byte address 0x4 - core index']
  #allocation1 [shape = 'u32[72,128]{1,0:T(1,128)}', space=vmem, size = 0x9000, scoped, tag = 'internal scratch']
  %s0 = inlined_call_operand.hbm [shape: f32[16,128], index: 0, kind: input, shape index: {}]
  %s1 = inlined_call_operand.hbm [shape: f32[128,512], index: 1, kind: input, shape index: {}]
  %s2 = inlined_call_operand.vmem [shape: f32[1,512], index: 2, kind: input, shape index: {}]
  %s3 = inlined_call_operand.hbm [shape: f32[512,128], index: 3, kind: input, shape index: {}]
  %s4 = inlined_call_operand.vmem [shape: f32[1,128], index: 4, kind: input, shape index: {}]
  %s5 = inlined_call_operand.hbm [shape: f32[16,128], index: 5, kind: output, shape index: {}]
  %s6 = sld [smem:[#allocation0]]
  $region65: #{positionwise_ffn.1} parent=0
    _
  %s8 = ssub.s32 1, %s6
  %s9 = scalar_select 0, %s8, %s6
  $region1: #{positionwise_ffn.1} parent=0
    #allocation2 [shape = 'u8[8192]{0}', space=vmem, size = 0x2000, scoped, tag = 'input window, operand 0']
    #allocation3 [shape = 's32[2]{0}', space=sflag, size = 0x8, scoped, tag = 'scoped memory for positionwise_ffn.1']
    #allocation4 [shape = 's32[2]{0}', space=sflag, size = 0x8, scoped, tag = 'scoped memory for positionwise_ffn.1']
    #allocation5 [shape = 'u8[262144]{0}', space=vmem, size = 0x40000, scoped, tag = 'input window, operand 1, single buffered']
    #allocation6 [shape = 's32[1]{0}', space=sflag, size = 0x4, scoped, tag = 'scoped memory for positionwise_ffn.1']
    #allocation7 [shape = 'u8[262144]{0}', space=vmem, size = 0x40000, scoped, tag = 'input window, operand 3, single buffered']
    #allocation8 [shape = 'u8[8192]{0}', space=vmem, size = 0x2000, scoped, tag = 'output window, operand 0']
    %10 = vsyncpa [#allocation3], 0
    %s11 = scalar_lea.sflag [#allocation3], 1
    %12 = vsyncpa %s11, 0
    %13 = vsyncpa [#allocation6], 0
    %14 = vsyncpa [#allocation4], 0
    %s15 = scalar_lea.sflag [#allocation4], 1
    %16 = vsyncpa %s15, 0
    loop: start=0, step=1, limit=4
    $region2: #{positionwise_ffn.1} parent=1 // loop_pre_header
      _
    $region3: #{positionwise_ffn.1} parent=1 // loop_header
      %s18 = sphi 0, %s22
      %p19 = scmp.ge.s32.totalorder %s18, 4
      %s28 = sphi 0, %s30
      %s31 = sphi 0, %s28
      %s32 = sphi 0, %s31
      %s48 = sphi 0, %s32
      %s52 = sphi 0, %s52
      %s54 = sphi 0, %s52
      %s55 = sphi 0, %s54
      %s69 = sphi 0, %s55
      %s73 = sphi 0, %s73
      %s75 = sphi 0, %s73
      %s76 = sphi 0, %s75
      %s90 = sphi 0, %s76
      %s94 = sphi 0, %s94
      %s96 = sphi 0, %s94
      %s97 = sphi 0, %s96
      %s111 = sphi 0, %s97
      %s115 = sphi 0, %s115
      %s117 = sphi 0, %s115
      %s118 = sphi 0, %s117
      %s132 = sphi 0, %s118
      %s138 = sphi 0, %s140
      %s141 = sphi 0, %s138
      %s142 = sphi 0, %s141
      %s158 = sphi 0, %s142
    $region4: #{positionwise_ffn.1} parent=1 // loop_header_branch
      %21 = sbr.rel (%p19) target = $region8
    $region5: #{positionwise_ffn.1} parent=1 // loop_body
      %s23 = ssub.s32 %s18, 1
      %s24 = ssub.s32 %s18, 2
      %s25 = sadd.s32 %s18, 1
      %s26 = ssub.s32 %s18, %s25
      %p27 = scmp.eq.s32.totalorder %s26, 0
      %s29 = sadd.s32 %s28, 1
      %s30 = scalar_select %p27, %s28, %s29
      %p33 = pneg %p27
      %p34 = scmp.eq.s32.totalorder %s18, 1
      %p35 = por %p33, %p34
      %p36 = scmp.ne.s32.totalorder %s28, %s31
      %p37 = scmp.eq.s32.totalorder %s18, 0
      %p38 = por %p36, %p37
      %p39 = scmp.ne.s32.totalorder %s28, %s31
      %p40 = scmp.eq.s32.totalorder %s23, 1
      %p41 = por %p39, %p40
      %p42 = scmp.ne.s32.totalorder %s31, %s32
      %p43 = scmp.eq.s32.totalorder %s23, 0
      %p44 = por %p42, %p43
      %p45 = scmp.ne.s32.totalorder %s31, %s32
      %p46 = scmp.eq.s32.totalorder %s24, 1
      %p47 = por %p45, %p46
      %p49 = scmp.ne.s32.totalorder %s32, %s48
      %p50 = scmp.eq.s32.totalorder %s24, 0
      %p51 = por %p49, %p50
      %s53 = sadd.s32 %s52, 1
      %p56 = scmp.eq.s32.totalorder %s18, 1
      %p57 = scmp.ne.s32.totalorder %s52, %s54
      %p58 = scmp.eq.s32.totalorder %s18, 0
      %p59 = por %p57, %p58
      %p60 = scmp.ne.s32.totalorder %s52, %s54
      %p61 = scmp.eq.s32.totalorder %s23, 1
      %p62 = por %p60, %p61
      %p63 = scmp.ne.s32.totalorder %s54, %s55
      %p64 = scmp.eq.s32.totalorder %s23, 0
      %p65 = por %p63, %p64
      %p66 = scmp.ne.s32.totalorder %s54, %s55
      %p67 = scmp.eq.s32.totalorder %s24, 1
      %p68 = por %p66, %p67
      %p70 = scmp.ne.s32.totalorder %s55, %s69
      %p71 = scmp.eq.s32.totalorder %s24, 0
      %p72 = por %p70, %p71
      %s74 = sadd.s32 %s73, 1
      %p77 = scmp.eq.s32.totalorder %s18, 1
      %p78 = scmp.ne.s32.totalorder %s73, %s75
      %p79 = scmp.eq.s32.totalorder %s18, 0
      %p80 = por %p78, %p79
      %p81 = scmp.ne.s32.totalorder %s73, %s75
      %p82 = scmp.eq.s32.totalorder %s23, 1
      %p83 = por %p81, %p82
      %p84 = scmp.ne.s32.totalorder %s75, %s76
      %p85 = scmp.eq.s32.totalorder %s23, 0
      %p86 = por %p84, %p85
      %p87 = scmp.ne.s32.totalorder %s75, %s76
      %p88 = scmp.eq.s32.totalorder %s24, 1
      %p89 = por %p87, %p88
      %p91 = scmp.ne.s32.totalorder %s76, %s90
      %p92 = scmp.eq.s32.totalorder %s24, 0
      %p93 = por %p91, %p92
      %s95 = sadd.s32 %s94, 1
      %p98 = scmp.eq.s32.totalorder %s18, 1
      %p99 = scmp.ne.s32.totalorder %s94, %s96
      %p100 = scmp.eq.s32.totalorder %s18, 0
      %p101 = por %p99, %p100
      %p102 = scmp.ne.s32.totalorder %s94, %s96
      %p103 = scmp.eq.s32.totalorder %s23, 1
      %p104 = por %p102, %p103
      %p105 = scmp.ne.s32.totalorder %s96, %s97
      %p106 = scmp.eq.s32.totalorder %s23, 0
      %p107 = por %p105, %p106
      %p108 = scmp.ne.s32.totalorder %s96, %s97
      %p109 = scmp.eq.s32.totalorder %s24, 1
      %p110 = por %p108, %p109
      %p112 = scmp.ne.s32.totalorder %s97, %s111
      %p113 = scmp.eq.s32.totalorder %s24, 0
      %p114 = por %p112, %p113
      %s116 = sadd.s32 %s115, 1
      %p119 = scmp.eq.s32.totalorder %s18, 1
      %p120 = scmp.ne.s32.totalorder %s115, %s117
      %p121 = scmp.eq.s32.totalorder %s18, 0
      %p122 = por %p120, %p121
      %p123 = scmp.ne.s32.totalorder %s115, %s117
      %p124 = scmp.eq.s32.totalorder %s23, 1
      %p125 = por %p123, %p124
      %p126 = scmp.ne.s32.totalorder %s117, %s118
      %p127 = scmp.eq.s32.totalorder %s23, 0
      %p128 = por %p126, %p127
      %p129 = scmp.ne.s32.totalorder %s117, %s118
      %p130 = scmp.eq.s32.totalorder %s24, 1
      %p131 = por %p129, %p130
      %p133 = scmp.ne.s32.totalorder %s118, %s132
      %p134 = scmp.eq.s32.totalorder %s24, 0
      %p135 = por %p133, %p134
      %s136 = ssub.s32 %s18, %s25
      %p137 = scmp.eq.s32.totalorder %s136, 0
      %s139 = sadd.s32 %s138, 1
      %s140 = scalar_select %p137, %s138, %s139
      %p143 = pneg %p137
      %p144 = scmp.eq.s32.totalorder %s18, 1
      %p145 = por %p143, %p144
      %p146 = scmp.ne.s32.totalorder %s138, %s141
      %p147 = scmp.eq.s32.totalorder %s18, 0
      %p148 = por %p146, %p147
      %p149 = scmp.ne.s32.totalorder %s138, %s141
      %p150 = scmp.eq.s32.totalorder %s23, 1
      %p151 = por %p149, %p150
      %p152 = scmp.ne.s32.totalorder %s141, %s142
      %p153 = scmp.eq.s32.totalorder %s23, 0
      %p154 = por %p152, %p153
      %p155 = scmp.ne.s32.totalorder %s141, %s142
      %p156 = scmp.eq.s32.totalorder %s24, 1
      %p157 = por %p155, %p156
      %p159 = scmp.ne.s32.totalorder %s142, %s158
      %p160 = scmp.eq.s32.totalorder %s24, 0
      %p161 = por %p159, %p160
      %p162 = scmp.le.s32.totalorder 1, %s18
      %p163 = scmp.lt.s32.totalorder %s18, 3
      %p164 = pnand %p162, %p163
      %p165 = pneg %p164
      // Predicated region
      $region9: #{positionwise_ffn.1} parent=5 // pred_check
        _
      $region10: #{positionwise_ffn.1} parent=5 // pred_check_branch
        %167 = sbr.rel (%p164) target = $region12
      $region11: #{positionwise_ffn.1} parent=5 // pred_region
        %s168 = ssub.s32 %s18, 1
        // Predicated region
        $region13: #{positionwise_ffn.1} parent=11 // pred_check
          %p169 = pneg %p65
        $region14: #{positionwise_ffn.1} parent=11 // pred_check_branch
          %171 = sbr.rel (%p169) target = $region16
        $region15: #{positionwise_ffn.1} parent=11 // pred_region
          %173 = vsyncadd [#allocation6], 0
          %s174 = sshll.u32 %s1, 4
          %s175 = int_to_ptr.hbm [resolvable:$true] %s174
          %s176 = sshll.u32 [#allocation5], 4
          %s177 = int_to_ptr.vmem [resolvable:$true] %s176
          %182 = dma.hbm_to_vmem [thread:$0]  %s175, 8192, %s177, [#allocation6], 512, 512, 32
        $region16: #{positionwise_ffn.1} parent=11 // pred_fallthru
          _
        // Predicated region
        $region17: #{positionwise_ffn.1} parent=11 // pred_check
          %p183 = pneg %p86
        $region18: #{positionwise_ffn.1} parent=11 // pred_check_branch
          %185 = sbr.rel (%p183) target = $region20
        $region19: #{positionwise_ffn.1} parent=11 // pred_region
          _
        $region20: #{positionwise_ffn.1} parent=11 // pred_fallthru
          _
        // Predicated region
        $region21: #{positionwise_ffn.1} parent=11 // pred_check
          %p186 = pneg %p107
        $region22: #{positionwise_ffn.1} parent=11 // pred_check_branch
          %188 = sbr.rel (%p186) target = $region24
        $region23: #{positionwise_ffn.1} parent=11 // pred_region
          %190 = vsyncadd [#allocation6], 0
          %s191 = sshll.u32 %s3, 4
          %s192 = int_to_ptr.hbm [resolvable:$true] %s191
          %s193 = sshll.u32 [#allocation7], 4
          %s194 = int_to_ptr.vmem [resolvable:$true] %s193
          %199 = dma.hbm_to_vmem [thread:$0]  %s192, 8192, %s194, [#allocation6], 128, 128, 8
        $region24: #{positionwise_ffn.1} parent=11 // pred_fallthru
          _
        // Predicated region
        $region25: #{positionwise_ffn.1} parent=11 // pred_check
          %p200 = pneg %p128
        $region26: #{positionwise_ffn.1} parent=11 // pred_check_branch
          %202 = sbr.rel (%p200) target = $region28
        $region27: #{positionwise_ffn.1} parent=11 // pred_region
          _
        $region28: #{positionwise_ffn.1} parent=11 // pred_fallthru
          _
      $region12: #{positionwise_ffn.1} parent=5 // pred_fallthru
        _
      %p203 = scmp.lt.s32.totalorder %s18, 2
      // Predicated region
      $region29: #{positionwise_ffn.1} parent=5 // pred_check
        %p204 = pneg %p203
      $region30: #{positionwise_ffn.1} parent=5 // pred_check_branch
        %206 = sbr.rel (%p204) target = $region32
      $region31: #{positionwise_ffn.1} parent=5 // pred_region
        // Predicated region
        $region33: #{positionwise_ffn.1} parent=31 // pred_check
          %p207 = pneg %p38
        $region34: #{positionwise_ffn.1} parent=31 // pred_check_branch
          %209 = sbr.rel (%p207) target = $region36
        $region35: #{positionwise_ffn.1} parent=31 // pred_region
          %s210 = sand.u32 %s28, 1
          %s211 = scalar_lea.sflag [#allocation3], %s210
          %s212 = sand.u32 %s28, 1
          %s213 = smul.addr %s212, 8
          %s214 = scalar_lea.vmem [#allocation2], %s213
          %216 = vsyncadd %s211, 0
          %s217 = smul.addr %s18, 8
          %s218 = scalar_lea.hbm %s0, %s217
          %s220 = sshll.u32 %s218, 4
          %s221 = int_to_ptr.hbm [resolvable:$true] %s220
          %s222 = sshll.u32 %s214, 4
          %s223 = int_to_ptr.vmem [resolvable:$true] %s222
          %225 = dma.hbm_to_vmem [thread:$0]  %s221, 128, %s223, %s211
        $region36: #{positionwise_ffn.1} parent=31 // pred_fallthru
          _
      $region32: #{positionwise_ffn.1} parent=5 // pred_fallthru
        _
      %p226 = scmp.le.s32.totalorder 1, %s18
      %p227 = scmp.lt.s32.totalorder %s18, 3
      %p228 = pnand %p226, %p227
      %p229 = pneg %p228
      // Predicated region
      $region37: #{positionwise_ffn.1} parent=5 // pred_check
        _
      $region38: #{positionwise_ffn.1} parent=5 // pred_check_branch
        %231 = sbr.rel (%p228) target = $region40
      $region39: #{positionwise_ffn.1} parent=5 // pred_region
        %s232 = ssub.s32 %s18, 1
        %s233 = sand.u32 %s31, 1
        %s234 = scalar_lea.sflag [#allocation3], %s233
        %s235 = sand.u32 %s31, 1
        %s236 = smul.addr %s235, 8
        %s237 = scalar_lea.vmem [#allocation2], %s236
        // Predicated region
        $region41: #{positionwise_ffn.1} parent=39 // pred_check
          %p238 = pneg %p44
        $region42: #{positionwise_ffn.1} parent=39 // pred_check_branch
          %240 = sbr.rel (%p238) target = $region44
        $region43: #{positionwise_ffn.1} parent=39 // pred_region
          %242 = dma.done %s234, 128
        $region44: #{positionwise_ffn.1} parent=39 // pred_fallthru
          _
        // Predicated region
        $region45: #{positionwise_ffn.1} parent=39 // pred_check
          %p243 = pneg %p65
        $region46: #{positionwise_ffn.1} parent=39 // pred_check_branch
          %245 = sbr.rel (%p243) target = $region48
        $region47: #{positionwise_ffn.1} parent=39 // pred_region
          %247 = dma.done [#allocation6], 8192
        $region48: #{positionwise_ffn.1} parent=39 // pred_fallthru
          _
        // Predicated region
        $region49: #{positionwise_ffn.1} parent=39 // pred_check
          %p248 = pneg %p107
        $region50: #{positionwise_ffn.1} parent=39 // pred_check_branch
          %250 = sbr.rel (%p248) target = $region52
        $region51: #{positionwise_ffn.1} parent=39 // pred_region
          %252 = dma.done [#allocation6], 8192
        $region52: #{positionwise_ffn.1} parent=39 // pred_fallthru
          _
        %s253 = sand.u32 %s31, 1
        %s254 = scalar_lea.sflag [#allocation3], %s253
        %s255 = sand.u32 %s31, 1
        %s256 = smul.addr %s255, 8
        %s257 = scalar_lea.vmem [#allocation2], %s256
        %p258 = pneg %p44
        %p259 = pneg %p41
        %p260 = pneg %p65
        %p261 = pneg %p62
        %p262 = pneg %p86
        %p263 = pneg %p83
        %p264 = pneg %p107
        %p265 = pneg %p104
        %p266 = pneg %p128
        %p267 = pneg %p125
        %p268 = pneg %p154
        %p269 = pneg %p151
        %s270 = sand.u32 %s141, 1
        %s271 = scalar_lea.sflag [#allocation4], %s270
        %s272 = sand.u32 %s141, 1
        %s273 = smul.addr %s272, 8
        %s274 = scalar_lea.vmem [#allocation8], %s273
        %v275 = vld [vmem:[%s237] sm:$0xff]
        %v276 = vld [vmem:[#allocation5] sm:$0xff]
        %v277 = vld [vmem:[#allocation5 + $0x8] sm:$0xff]
        %v278 = vld [vmem:[#allocation5 + $0x10] sm:$0xff]
        %v279 = vld [vmem:[#allocation5 + $0x18] sm:$0xff]
        %v280 = vld [vmem:[#allocation5 + $0x20] sm:$0xff]
        %v281 = vld [vmem:[#allocation5 + $0x28] sm:$0xff]
        %v282 = vld [vmem:[#allocation5 + $0x30] sm:$0xff]
        %v283 = vld [vmem:[#allocation5 + $0x38] sm:$0xff]
        %v284 = vld [vmem:[#allocation5 + $0x40] sm:$0xff]
        %v285 = vld [vmem:[#allocation5 + $0x48] sm:$0xff]
        %v286 = vld [vmem:[#allocation5 + $0x50] sm:$0xff]
        %v287 = vld [vmem:[#allocation5 + $0x58] sm:$0xff]
        %v288 = vld [vmem:[#allocation5 + $0x60] sm:$0xff]
        %v289 = vld [vmem:[#allocation5 + $0x68] sm:$0xff]
        %v290 = vld [vmem:[#allocation5 + $0x70] sm:$0xff]
        %v291 = vld [vmem:[#allocation5 + $0x78] sm:$0xff]
        %v292 = vld [vmem:[#allocation5 + $0x80] sm:$0xff]
        %v293 = vld [vmem:[#allocation5 + $0x88] sm:$0xff]
        %v294 = vld [vmem:[#allocation5 + $0x90] sm:$0xff]
        %v295 = vld [vmem:[#allocation5 + $0x98] sm:$0xff]
        %v296 = vld [vmem:[#allocation5 + $0xa0] sm:$0xff]
        %v297 = vld [vmem:[#allocation5 + $0xa8] sm:$0xff]
        %v298 = vld [vmem:[#allocation5 + $0xb0] sm:$0xff]
        %v299 = vld [vmem:[#allocation5 + $0xb8] sm:$0xff]
        %v300 = vld [vmem:[#allocation5 + $0xc0] sm:$0xff]
        %v301 = vld [vmem:[#allocation5 + $0xc8] sm:$0xff]
        %v302 = vld [vmem:[#allocation5 + $0xd0] sm:$0xff]
        %v303 = vld [vmem:[#allocation5 + $0xd8] sm:$0xff]
        %v304 = vld [vmem:[#allocation5 + $0xe0] sm:$0xff]
        %v305 = vld [vmem:[#allocation5 + $0xe8] sm:$0xff]
        %v306 = vld [vmem:[#allocation5 + $0xf0] sm:$0xff]
        %v307 = vld [vmem:[#allocation5 + $0xf8] sm:$0xff]
        %v308 = vld [vmem:[#allocation5 + $0x100] sm:$0xff]
        %v309 = vld [vmem:[#allocation5 + $0x108] sm:$0xff]
        %v310 = vld [vmem:[#allocation5 + $0x110] sm:$0xff]
        %v311 = vld [vmem:[#allocation5 + $0x118] sm:$0xff]
        %v312 = vld [vmem:[#allocation5 + $0x120] sm:$0xff]
        %v313 = vld [vmem:[#allocation5 + $0x128] sm:$0xff]
        %v314 = vld [vmem:[#allocation5 + $0x130] sm:$0xff]
        %v315 = vld [vmem:[#allocation5 + $0x138] sm:$0xff]
        %v316 = vld [vmem:[#allocation5 + $0x140] sm:$0xff]
        %v317 = vld [vmem:[#allocation5 + $0x148] sm:$0xff]
        %v318 = vld [vmem:[#allocation5 + $0x150] sm:$0xff]
        %v319 = vld [vmem:[#allocation5 + $0x158] sm:$0xff]
        %v320 = vld [vmem:[#allocation5 + $0x160] sm:$0xff]
        %v321 = vld [vmem:[#allocation5 + $0x168] sm:$0xff]
        %v322 = vld [vmem:[#allocation5 + $0x170] sm:$0xff]
        %v323 = vld [vmem:[#allocation5 + $0x178] sm:$0xff]
        %v324 = vld [vmem:[#allocation5 + $0x180] sm:$0xff]
        %v325 = vld [vmem:[#allocation5 + $0x188] sm:$0xff]
        %v326 = vld [vmem:[#allocation5 + $0x190] sm:$0xff]
        %v327 = vld [vmem:[#allocation5 + $0x198] sm:$0xff]
        %v328 = vld [vmem:[#allocation5 + $0x1a0] sm:$0xff]
        %v329 = vld [vmem:[#allocation5 + $0x1a8] sm:$0xff]
        %v330 = vld [vmem:[#allocation5 + $0x1b0] sm:$0xff]
        %v331 = vld [vmem:[#allocation5 + $0x1b8] sm:$0xff]
        %v332 = vld [vmem:[#allocation5 + $0x1c0] sm:$0xff]
        %v333 = vld [vmem:[#allocation5 + $0x1c8] sm:$0xff]
        %v334 = vld [vmem:[#allocation5 + $0x1d0] sm:$0xff]
        %v335 = vld [vmem:[#allocation5 + $0x1d8] sm:$0xff]
        %v336 = vld [vmem:[#allocation5 + $0x1e0] sm:$0xff]
        %v337 = vld [vmem:[#allocation5 + $0x1e8] sm:$0xff]
        %v338 = vld [vmem:[#allocation5 + $0x1f0] sm:$0xff]
        %v339 = vld [vmem:[#allocation5 + $0x1f8] sm:$0xff]
        %v340 = vld [vmem:[%s2] sm:$0xf]
        %v342 = vperm.slane %v340, 0
        %v343 = vperm.slane %v340, 1
        %v344 = vperm.slane %v340, 2
        %v345 = vperm.slane %v340, 3
        %350 = vmatpush.msra.mxu0 %v336
        %351 = vmatpush.msra.mxu0 %v332
        %352 = vmatpush.msra.mxu0 %v328
        %353 = vmatpush.msra.mxu0 %v324
        %354 = vmatpush.msra.mxu0 %v320
        %355 = vmatpush.msra.mxu0 %v316
        %356 = vmatpush.msra.mxu0 %v312
        %357 = vmatpush.msra.mxu0 %v308
        %358 = vmatpush.msra.mxu0 %v304
        %359 = vmatpush.msra.mxu0 %v300
        %360 = vmatpush.msra.mxu0 %v296
        %361 = vmatpush.msra.mxu0 %v292
        %362 = vmatpush.msra.mxu0 %v288
        %363 = vmatpush.msra.mxu0 %v284
        %364 = vmatpush.msra.mxu0 %v280
        %365 = vmatpush.msra.mxu0 %v276
        %366 = vmatmul.f32.gmra.mxu0 %v275
        %v367 = vpop.f32.mrf.mxu0
        %v368 = vadd.f32 %v342, %v367
        %369 = vdwg.mxu0
        %370 = vmatpush.msra.mxu0 %v337
        %371 = vmatpush.msra.mxu0 %v333
        %372 = vmatpush.msra.mxu0 %v329
        %373 = vmatpush.msra.mxu0 %v325
        %374 = vmatpush.msra.mxu0 %v321
        %375 = vmatpush.msra.mxu0 %v317
        %376 = vmatpush.msra.mxu0 %v313
        %377 = vmatpush.msra.mxu0 %v309
        %378 = vmatpush.msra.mxu0 %v305
        %379 = vmatpush.msra.mxu0 %v301
        %380 = vmatpush.msra.mxu0 %v297
        %381 = vmatpush.msra.mxu0 %v293
        %382 = vmatpush.msra.mxu0 %v289
        %383 = vmatpush.msra.mxu0 %v285
        %384 = vmatpush.msra.mxu0 %v281
        %385 = vmatpush.msra.mxu0 %v277
        %386 = vmatmul.f32.gmra.mxu0 %v275
        %v387 = vpop.f32.mrf.mxu0
        %v388 = vadd.f32 %v343, %v387
        %389 = vdwg.mxu0
        %390 = vmatpush.msra.mxu0 %v338
        %391 = vmatpush.msra.mxu0 %v334
        %392 = vmatpush.msra.mxu0 %v330
        %393 = vmatpush.msra.mxu0 %v326
        %394 = vmatpush.msra.mxu0 %v322
        %395 = vmatpush.msra.mxu0 %v318
        %396 = vmatpush.msra.mxu0 %v314
        %397 = vmatpush.msra.mxu0 %v310
        %398 = vmatpush.msra.mxu0 %v306
        %399 = vmatpush.msra.mxu0 %v302
        %400 = vmatpush.msra.mxu0 %v298
        %401 = vmatpush.msra.mxu0 %v294
        %402 = vmatpush.msra.mxu0 %v290
        %403 = vmatpush.msra.mxu0 %v286
        %404 = vmatpush.msra.mxu0 %v282
        %405 = vmatpush.msra.mxu0 %v278
        %406 = vmatmul.f32.gmra.mxu0 %v275
        %v407 = vpop.f32.mrf.mxu0
        %v408 = vadd.f32 %v344, %v407
        %409 = vdwg.mxu0
        %410 = vmatpush.msra.mxu0 %v339
        %411 = vmatpush.msra.mxu0 %v335
        %412 = vmatpush.msra.mxu0 %v331
        %413 = vmatpush.msra.mxu0 %v327
        %414 = vmatpush.msra.mxu0 %v323
        %415 = vmatpush.msra.mxu0 %v319
        %416 = vmatpush.msra.mxu0 %v315
        %417 = vmatpush.msra.mxu0 %v311
        %418 = vmatpush.msra.mxu0 %v307
        %419 = vmatpush.msra.mxu0 %v303
        %420 = vmatpush.msra.mxu0 %v299
        %421 = vmatpush.msra.mxu0 %v295
        %422 = vmatpush.msra.mxu0 %v291
        %423 = vmatpush.msra.mxu0 %v287
        %424 = vmatpush.msra.mxu0 %v283
        %425 = vmatpush.msra.mxu0 %v279
        %426 = vmatmul.f32.gmra.mxu0 %v275
        %v427 = vpop.f32.mrf.mxu0
        %v428 = vadd.f32 %v345, %v427
        %429 = vdwg.mxu0
        %v430 = vmul.f32 %v368, 0.5
        %v431 = vmul.f32 %v388, 0.5
        %v432 = vmul.f32 %v408, 0.5
        %v433 = vmul.f32 %v428, 0.5
        %v434 = vmul.f32 %v368, 0.70710677
        %v435 = vmul.f32 %v388, 0.70710677
        %v436 = vmul.f32 %v408, 0.70710677
        %v437 = vmul.f32 %v428, 0.70710677
        %v438 = vmul.f32 %v434, %v434
        %v439 = vmin.f32 16.0, %v438
        %v440 = vmul.f32 %v439, 2.1237322e-06
        %v441 = vadd.f32 %v440, 0.00028619796
        %v442 = vmul.f32 %v439, %v441
        %v443 = vadd.f32 %v442, 0.0036580483
        %v444 = vmul.f32 %v439, %v443
        %v445 = vadd.f32 %v444, 0.05243302
        %v446 = vmul.f32 %v439, %v445
        %v447 = vadd.f32 %v446, 0.18741608
        %v448 = vmul.f32 %v439, %v447
        %v449 = vadd.f32 %v448, 1.1283791
        %v450 = vmul.f32 %v434, %v449
        %v451 = vmul.f32 %v439, 3.8918573e-05
        %v452 = vadd.f32 %v451, 0.001143296
        %v453 = vmul.f32 %v439, %v452
        %v454 = vadd.f32 %v453, 0.014752088
        %v455 = vmul.f32 %v439, %v454
        %v456 = vadd.f32 %v455, 0.112945676
        %v457 = vmul.f32 %v439, %v456
        %v458 = vadd.f32 %v457, 0.4994258
        %v459 = vmul.f32 %v439, %v458
        %v460 = vadd.f32 %v459, 1.0
        %v461 = vrcp.pop %v460
        %v462 = vmul.f32 %v460, %v461
        %v463 = vsub.f32 1.0, %v462
        %v464 = vmul.f32 %v461, %v463
        %v465 = vadd.f32 %v461, %v464
        %vm466 = vweird.f32 %v460
        %vm467 = vweird.f32 %v461
        %vm468 = vmor %vm466, %vm467
        %v469 = vsel %vm468, %v461, %v465
        %v470 = vand.u32 2147483647, %v460
        %vm471 = vcmp.eq.f32.partialorder %v470, 8.507059e+37
        %v472 = vand.u32 %v460, 2147483648
        %v473 = vor.u32 1.1754944e-38, %v472
        %v474 = vsel %vm471, %v473, %v469
        %v475 = vmul.f32 %v450, %v474
        %v476 = vmin.f32 %v475, 1.0
        %v477 = vmax.f32 %v476, -1.0
        %v478 = vmul.f32 %v435, %v435
        %v479 = vmin.f32 16.0, %v478
        %v480 = vmul.f32 %v479, 2.1237322e-06
        %v481 = vadd.f32 %v480, 0.00028619796
        %v482 = vmul.f32 %v479, %v481
        %v483 = vadd.f32 %v482, 0.0036580483
        %v484 = vmul.f32 %v479, %v483
        %v485 = vadd.f32 %v484, 0.05243302
        %v486 = vmul.f32 %v479, %v485
        %v487 = vadd.f32 %v486, 0.18741608
        %v488 = vmul.f32 %v479, %v487
        %v489 = vadd.f32 %v488, 1.1283791
        %v490 = vmul.f32 %v435, %v489
        %v491 = vmul.f32 %v479, 3.8918573e-05
        %v492 = vadd.f32 %v491, 0.001143296
        %v493 = vmul.f32 %v479, %v492
        %v494 = vadd.f32 %v493, 0.014752088
        %v495 = vmul.f32 %v479, %v494
        %v496 = vadd.f32 %v495, 0.112945676
        %v497 = vmul.f32 %v479, %v496
        %v498 = vadd.f32 %v497, 0.4994258
        %v499 = vmul.f32 %v479, %v498
        %v500 = vadd.f32 %v499, 1.0
        %v501 = vrcp.pop %v500
        %v502 = vmul.f32 %v500, %v501
        %v503 = vsub.f32 1.0, %v502
        %v504 = vmul.f32 %v501, %v503
        %v505 = vadd.f32 %v501, %v504
        %vm506 = vweird.f32 %v500
        %vm507 = vweird.f32 %v501
        %vm508 = vmor %vm506, %vm507
        %v509 = vsel %vm508, %v501, %v505
        %v510 = vand.u32 2147483647, %v500
        %vm511 = vcmp.eq.f32.partialorder %v510, 8.507059e+37
        %v512 = vand.u32 %v500, 2147483648
        %v513 = vor.u32 1.1754944e-38, %v512
        %v514 = vsel %vm511, %v513, %v509
        %v515 = vmul.f32 %v490, %v514
        %v516 = vmin.f32 %v515, 1.0
        %v517 = vmax.f32 %v516, -1.0
        %v518 = vmul.f32 %v436, %v436
        %v519 = vmin.f32 16.0, %v518
        %v520 = vmul.f32 %v519, 2.1237322e-06
        %v521 = vadd.f32 %v520, 0.00028619796
        %v522 = vmul.f32 %v519, %v521
        %v523 = vadd.f32 %v522, 0.0036580483
        %v524 = vmul.f32 %v519, %v523
        %v525 = vadd.f32 %v524, 0.05243302
        %v526 = vmul.f32 %v519, %v525
        %v527 = vadd.f32 %v526, 0.18741608
        %v528 = vmul.f32 %v519, %v527
        %v529 = vadd.f32 %v528, 1.1283791
        %v530 = vmul.f32 %v436, %v529
        %v531 = vmul.f32 %v519, 3.8918573e-05
        %v532 = vadd.f32 %v531, 0.001143296
        %v533 = vmul.f32 %v519, %v532
        %v534 = vadd.f32 %v533, 0.014752088
        %v535 = vmul.f32 %v519, %v534
        %v536 = vadd.f32 %v535, 0.112945676
        %v537 = vmul.f32 %v519, %v536
        %v538 = vadd.f32 %v537, 0.4994258
        %v539 = vmul.f32 %v519, %v538
        %v540 = vadd.f32 %v539, 1.0
        %v541 = vrcp.pop %v540
        %v542 = vmul.f32 %v540, %v541
        %v543 = vsub.f32 1.0, %v542
        %v544 = vmul.f32 %v541, %v543
        %v545 = vadd.f32 %v541, %v544
        %vm546 = vweird.f32 %v540
        %vm547 = vweird.f32 %v541
        %vm548 = vmor %vm546, %vm547
        %v549 = vsel %vm548, %v541, %v545
        %v550 = vand.u32 2147483647, %v540
        %vm551 = vcmp.eq.f32.partialorder %v550, 8.507059e+37
        %v552 = vand.u32 %v540, 2147483648
        %v553 = vor.u32 1.1754944e-38, %v552
        %v554 = vsel %vm551, %v553, %v549
        %v555 = vmul.f32 %v530, %v554
        %v556 = vmin.f32 %v555, 1.0
        %v557 = vmax.f32 %v556, -1.0
        %v558 = vmul.f32 %v437, %v437
        %v559 = vmin.f32 16.0, %v558
        %v560 = vmul.f32 %v559, 2.1237322e-06
        %v561 = vadd.f32 %v560, 0.00028619796
        %v562 = vmul.f32 %v559, %v561
        %v563 = vadd.f32 %v562, 0.0036580483
        %v564 = vmul.f32 %v559, %v563
        %v565 = vadd.f32 %v564, 0.05243302
        %v566 = vmul.f32 %v559, %v565
        %v567 = vadd.f32 %v566, 0.18741608
        %v568 = vmul.f32 %v559, %v567
        %v569 = vadd.f32 %v568, 1.1283791
        %v570 = vmul.f32 %v437, %v569
        %v571 = vmul.f32 %v559, 3.8918573e-05
        %v572 = vadd.f32 %v571, 0.001143296
        %v573 = vmul.f32 %v559, %v572
        %v574 = vadd.f32 %v573, 0.014752088
        %v575 = vmul.f32 %v559, %v574
        %v576 = vadd.f32 %v575, 0.112945676
        %v577 = vmul.f32 %v559, %v576
        %v578 = vadd.f32 %v577, 0.4994258
        %v579 = vmul.f32 %v559, %v578
        %v580 = vadd.f32 %v579, 1.0
        %v581 = vrcp.pop %v580
        %v582 = vmul.f32 %v580, %v581
        %v583 = vsub.f32 1.0, %v582
        %v584 = vmul.f32 %v581, %v583
        %v585 = vadd.f32 %v581, %v584
        %vm586 = vweird.f32 %v580
        %vm587 = vweird.f32 %v581
        %vm588 = vmor %vm586, %vm587
        %v589 = vsel %vm588, %v581, %v585
        %v590 = vand.u32 2147483647, %v580
        %vm591 = vcmp.eq.f32.partialorder %v590, 8.507059e+37
        %v592 = vand.u32 %v580, 2147483648
        %v593 = vor.u32 1.1754944e-38, %v592
        %v594 = vsel %vm591, %v593, %v589
        %v595 = vmul.f32 %v570, %v594
        %v596 = vmin.f32 %v595, 1.0
        %v597 = vmax.f32 %v596, -1.0
        %v598 = vadd.f32 %v477, 1.0
        %v599 = vadd.f32 %v517, 1.0
        %v600 = vadd.f32 %v557, 1.0
        %v601 = vadd.f32 %v597, 1.0
        %v602 = vmul.f32 %v430, %v598
        %v603 = vmul.f32 %v431, %v599
        %v604 = vmul.f32 %v432, %v600
        %v605 = vmul.f32 %v433, %v601
        %v606 = vld [vmem:[#allocation7] sm:$0xff]
        %v607 = vld [vmem:[#allocation7 + $0x8] sm:$0xff]
        %v608 = vld [vmem:[#allocation7 + $0x10] sm:$0xff]
        %v609 = vld [vmem:[#allocation7 + $0x18] sm:$0xff]
        %v610 = vld [vmem:[#allocation7 + $0x20] sm:$0xff]
        %v611 = vld [vmem:[#allocation7 + $0x28] sm:$0xff]
        %v612 = vld [vmem:[#allocation7 + $0x30] sm:$0xff]
        %v613 = vld [vmem:[#allocation7 + $0x38] sm:$0xff]
        %v614 = vld [vmem:[#allocation7 + $0x40] sm:$0xff]
        %v615 = vld [vmem:[#allocation7 + $0x48] sm:$0xff]
        %v616 = vld [vmem:[#allocation7 + $0x50] sm:$0xff]
        %v617 = vld [vmem:[#allocation7 + $0x58] sm:$0xff]
        %v618 = vld [vmem:[#allocation7 + $0x60] sm:$0xff]
        %v619 = vld [vmem:[#allocation7 + $0x68] sm:$0xff]
        %v620 = vld [vmem:[#allocation7 + $0x70] sm:$0xff]
        %v621 = vld [vmem:[#allocation7 + $0x78] sm:$0xff]
        %v622 = vld [vmem:[#allocation7 + $0x80] sm:$0xff]
        %v623 = vld [vmem:[#allocation7 + $0x88] sm:$0xff]
        %v624 = vld [vmem:[#allocation7 + $0x90] sm:$0xff]
        %v625 = vld [vmem:[#allocation7 + $0x98] sm:$0xff]
        %v626 = vld [vmem:[#allocation7 + $0xa0] sm:$0xff]
        %v627 = vld [vmem:[#allocation7 + $0xa8] sm:$0xff]
        %v628 = vld [vmem:[#allocation7 + $0xb0] sm:$0xff]
        %v629 = vld [vmem:[#allocation7 + $0xb8] sm:$0xff]
        %v630 = vld [vmem:[#allocation7 + $0xc0] sm:$0xff]
        %v631 = vld [vmem:[#allocation7 + $0xc8] sm:$0xff]
        %v632 = vld [vmem:[#allocation7 + $0xd0] sm:$0xff]
        %v633 = vld [vmem:[#allocation7 + $0xd8] sm:$0xff]
        %v634 = vld [vmem:[#allocation7 + $0xe0] sm:$0xff]
        %v635 = vld [vmem:[#allocation7 + $0xe8] sm:$0xff]
        %v636 = vld [vmem:[#allocation7 + $0xf0] sm:$0xff]
        %v637 = vld [vmem:[#allocation7 + $0xf8] sm:$0xff]
        %v638 = vld [vmem:[#allocation7 + $0x100] sm:$0xff]
        %v639 = vld [vmem:[#allocation7 + $0x108] sm:$0xff]
        %v640 = vld [vmem:[#allocation7 + $0x110] sm:$0xff]
        %v641 = vld [vmem:[#allocation7 + $0x118] sm:$0xff]
        %v642 = vld [vmem:[#allocation7 + $0x120] sm:$0xff]
        %v643 = vld [vmem:[#allocation7 + $0x128] sm:$0xff]
        %v644 = vld [vmem:[#allocation7 + $0x130] sm:$0xff]
        %v645 = vld [vmem:[#allocation7 + $0x138] sm:$0xff]
        %v646 = vld [vmem:[#allocation7 + $0x140] sm:$0xff]
        %v647 = vld [vmem:[#allocation7 + $0x148] sm:$0xff]
        %v648 = vld [vmem:[#allocation7 + $0x150] sm:$0xff]
        %v649 = vld [vmem:[#allocation7 + $0x158] sm:$0xff]
        %v650 = vld [vmem:[#allocation7 + $0x160] sm:$0xff]
        %v651 = vld [vmem:[#allocation7 + $0x168] sm:$0xff]
        %v652 = vld [vmem:[#allocation7 + $0x170] sm:$0xff]
        %v653 = vld [vmem:[#allocation7 + $0x178] sm:$0xff]
        %v654 = vld [vmem:[#allocation7 + $0x180] sm:$0xff]
        %v655 = vld [vmem:[#allocation7 + $0x188] sm:$0xff]
        %v656 = vld [vmem:[#allocation7 + $0x190] sm:$0xff]
        %v657 = vld [vmem:[#allocation7 + $0x198] sm:$0xff]
        %v658 = vld [vmem:[#allocation7 + $0x1a0] sm:$0xff]
        %v659 = vld [vmem:[#allocation7 + $0x1a8] sm:$0xff]
        %v660 = vld [vmem:[#allocation7 + $0x1b0] sm:$0xff]
        %v661 = vld [vmem:[#allocation7 + $0x1b8] sm:$0xff]
        %v662 = vld [vmem:[#allocation7 + $0x1c0] sm:$0xff]
        %v663 = vld [vmem:[#allocation7 + $0x1c8] sm:$0xff]
        %v664 = vld [vmem:[#allocation7 + $0x1d0] sm:$0xff]
        %v665 = vld [vmem:[#allocation7 + $0x1d8] sm:$0xff]
        %v666 = vld [vmem:[#allocation7 + $0x1e0] sm:$0xff]
        %v667 = vld [vmem:[#allocation7 + $0x1e8] sm:$0xff]
        %v668 = vld [vmem:[#allocation7 + $0x1f0] sm:$0xff]
        %v669 = vld [vmem:[#allocation7 + $0x1f8] sm:$0xff]
        %v670 = vld [vmem:[%s4] sm:$0x1]
        %v672 = vperm.slane %v670, 0
        %674 = vmatpush.msra.mxu0 %v621
        %675 = vmatpush.msra.mxu0 %v620
        %676 = vmatpush.msra.mxu0 %v619
        %677 = vmatpush.msra.mxu0 %v618
        %678 = vmatpush.msra.mxu0 %v617
        %679 = vmatpush.msra.mxu0 %v616
        %680 = vmatpush.msra.mxu0 %v615
        %681 = vmatpush.msra.mxu0 %v614
        %682 = vmatpush.msra.mxu0 %v613
        %683 = vmatpush.msra.mxu0 %v612
        %684 = vmatpush.msra.mxu0 %v611
        %685 = vmatpush.msra.mxu0 %v610
        %686 = vmatpush.msra.mxu0 %v609
        %687 = vmatpush.msra.mxu0 %v608
        %688 = vmatpush.msra.mxu0 %v607
        %689 = vmatpush.msra.mxu0 %v606
        %690 = vmatmul.f32.gmra.mxu0 %v602
        %v691 = vpop.f32.mrf.mxu0
        %v692 = vadd.f32 %v672, %v691
        %693 = vdwg.mxu0
        %694 = vmatpush.msra.mxu0 %v637
        %695 = vmatpush.msra.mxu0 %v636
        %696 = vmatpush.msra.mxu0 %v635
        %697 = vmatpush.msra.mxu0 %v634
        %698 = vmatpush.msra.mxu0 %v633
        %699 = vmatpush.msra.mxu0 %v632
        %700 = vmatpush.msra.mxu0 %v631
        %701 = vmatpush.msra.mxu0 %v630
        %702 = vmatpush.msra.mxu0 %v629
        %703 = vmatpush.msra.mxu0 %v628
        %704 = vmatpush.msra.mxu0 %v627
        %705 = vmatpush.msra.mxu0 %v626
        %706 = vmatpush.msra.mxu0 %v625
        %707 = vmatpush.msra.mxu0 %v624
        %708 = vmatpush.msra.mxu0 %v623
        %709 = vmatpush.msra.mxu0 %v622
        %710 = vmatmul.f32.gmra.mxu0 %v603
        %v711 = vpop.f32.mrf.mxu0
        %v712 = vadd.f32 %v692, %v711
        %713 = vdwg.mxu0
        %714 = vmatpush.msra.mxu0 %v653
        %715 = vmatpush.msra.mxu0 %v652
        %716 = vmatpush.msra.mxu0 %v651
        %717 = vmatpush.msra.mxu0 %v650
        %718 = vmatpush.msra.mxu0 %v649
        %719 = vmatpush.msra.mxu0 %v648
        %720 = vmatpush.msra.mxu0 %v647
        %721 = vmatpush.msra.mxu0 %v646
        %722 = vmatpush.msra.mxu0 %v645
        %723 = vmatpush.msra.mxu0 %v644
        %724 = vmatpush.msra.mxu0 %v643
        %725 = vmatpush.msra.mxu0 %v642
        %726 = vmatpush.msra.mxu0 %v641
        %727 = vmatpush.msra.mxu0 %v640
        %728 = vmatpush.msra.mxu0 %v639
        %729 = vmatpush.msra.mxu0 %v638
        %730 = vmatmul.f32.gmra.mxu0 %v604
        %v731 = vpop.f32.mrf.mxu0
        %v732 = vadd.f32 %v712, %v731
        %733 = vdwg.mxu0
        %734 = vmatpush.msra.mxu0 %v669
        %735 = vmatpush.msra.mxu0 %v668
        %736 = vmatpush.msra.mxu0 %v667
        %737 = vmatpush.msra.mxu0 %v666
        %738 = vmatpush.msra.mxu0 %v665
        %739 = vmatpush.msra.mxu0 %v664
        %740 = vmatpush.msra.mxu0 %v663
        %741 = vmatpush.msra.mxu0 %v662
        %742 = vmatpush.msra.mxu0 %v661
        %743 = vmatpush.msra.mxu0 %v660
        %744 = vmatpush.msra.mxu0 %v659
        %745 = vmatpush.msra.mxu0 %v658
        %746 = vmatpush.msra.mxu0 %v657
        %747 = vmatpush.msra.mxu0 %v656
        %748 = vmatpush.msra.mxu0 %v655
        %749 = vmatpush.msra.mxu0 %v654
        %750 = vmatmul.f32.gmra.mxu0 %v605
        %v751 = vpop.f32.mrf.mxu0
        %v752 = vadd.f32 %v732, %v751
        %753 = vdwg.mxu0
        %754 = vst [vmem:[%s274] sm:$0xff] %v752
        %s755 = sand.u32 %s141, 1
        %s756 = scalar_lea.sflag [#allocation4], %s755
        %s757 = sand.u32 %s141, 1
        %s758 = smul.addr %s757, 8
        %s759 = scalar_lea.vmem [#allocation8], %s758
        // Predicated region
        $region53: #{positionwise_ffn.1} parent=39 // pred_check
          %p760 = pneg %p151
        $region54: #{positionwise_ffn.1} parent=39 // pred_check_branch
          %762 = sbr.rel (%p760) target = $region56
        $region55: #{positionwise_ffn.1} parent=39 // pred_region
          %764 = vsyncadd %s756, 0
          %s765 = smul.addr %s23, 8
          %s766 = scalar_lea.hbm %s5, %s765
          %s768 = sshll.u32 %s759, 4
          %s769 = int_to_ptr.vmem [resolvable:$true] %s768
          %s770 = sshll.u32 %s766, 4
          %s771 = int_to_ptr.hbm [resolvable:$true] %s770
          %773 = dma.vmem_to_hbm [thread:$0]  %s769, 128, %s771, %s756
        $region56: #{positionwise_ffn.1} parent=39 // pred_fallthru
          _
      $region40: #{positionwise_ffn.1} parent=5 // pred_fallthru
        _
      %p774 = scmp.le.s32.totalorder 2, %s18
      // Predicated region
      $region57: #{positionwise_ffn.1} parent=5 // pred_check
        %p775 = pneg %p774
      $region58: #{positionwise_ffn.1} parent=5 // pred_check_branch
        %777 = sbr.rel (%p775) target = $region60
      $region59: #{positionwise_ffn.1} parent=5 // pred_region
        %s778 = ssub.s32 %s18, 2
        // Predicated region
        $region61: #{positionwise_ffn.1} parent=59 // pred_check
          %p779 = pneg %p157
        $region62: #{positionwise_ffn.1} parent=59 // pred_check_branch
          %781 = sbr.rel (%p779) target = $region64
        $region63: #{positionwise_ffn.1} parent=59 // pred_region
          %s782 = sand.u32 %s142, 1
          %s783 = scalar_lea.sflag [#allocation4], %s782
          %s784 = sand.u32 %s142, 1
          %s785 = smul.addr %s784, 8
          %s786 = scalar_lea.vmem [#allocation8], %s785
          %788 = dma.done %s783, 128
        $region64: #{positionwise_ffn.1} parent=59 // pred_fallthru
          _
      $region60: #{positionwise_ffn.1} parent=5 // pred_fallthru
        _
    $region6: #{positionwise_ffn.1} parent=1 // loop_footer
      %s22 = sadd.s32 1, %s18
    $region7: #{positionwise_ffn.1} parent=1 // loop_footer_branch
      %17 = sbr.rel target = $region3
    $region8: #{positionwise_ffn.1} parent=1 // loop_exit
      _
    %789 = vsyncpa [#allocation3], 1
    %s790 = scalar_lea.sflag [#allocation3], 1
    %791 = vsyncpa %s790, 1
    %792 = vsyncpa [#allocation6], 1
    %793 = vsyncpa [#allocation4], 1
    %s794 = scalar_lea.sflag [#allocation4], 1
    %795 = vsyncpa %s794, 1

</llo_original>
